<compile_context>
chip_gen: v6e
topology: v6e:2x2x1
jax: 0.10.0
libtpu: 0.0.40
codegen_flags: <defaults>
</compile_context>

<pallas_src>
import functools
import math

import jax
import jax.numpy as jnp
from jax import lax
from jax.experimental import pallas as pl
from jax.experimental.pallas import tpu as pltpu


def _round_up(a, b):
    return (a + b - 1) // b * b


def _cdiv(a, b):
    return (a + b - 1) // b


def _vmem_block_bytes(shape, dtype):
    """Rough VMEM footprint of one block (last two dims padded to tiles)."""
    itemsize = jnp.dtype(dtype).itemsize
    packing = max(1, 4 // itemsize)
    if len(shape) < 2:
        return _round_up(math.prod(shape) * itemsize, 4096)
    lead = math.prod(shape[:-2]) if len(shape) > 2 else 1
    sub = _round_up(shape[-2], 8 * packing)
    lane = _round_up(shape[-1], 128)
    return lead * sub * lane * itemsize


def _overlap_patch_embed_kernel(x_ref, w_ref, b_ref, g_ref, beta_ref, o_ref,
                                *, Q, TH, W_blk, n_true, eps):
    """One grid step: TH output rows x W_blk output cols of one batch element.

    x_ref    : (1, Hq, Wq, s*s*C)   space-to-depth padded input (whole image,
                                    resident across the inner row-tile axis)
    w_ref    : (Q*Q, s*s*C, N_pad)  regrouped + zero-padded conv weight
    b_ref    : (1, N_pad) f32       conv bias      (zero in padded columns)
    g_ref    : (1, N_pad) f32       LN gamma       (ZERO in padded columns)
    beta_ref : (1, N_pad) f32       LN beta        (zero in padded columns)
    o_ref    : (1, TH*W_blk, N_pad) output rows for this tile
    """
    ssc = x_ref.shape[-1]
    n_pad = o_ref.shape[-1]
    m_tile = TH * W_blk

    r = pl.program_id(1)
    hq0 = r * TH

    # Conv as Q*Q accumulating MXU dots over contiguous s2d windows.
    acc = jnp.zeros((m_tile, n_pad), jnp.float32)
    for qh in range(Q):
        for qw in range(Q):
            patch = x_ref[0, pl.ds(hq0 + qh, TH), pl.ds(qw, W_blk), :]
            lhs = patch.reshape(m_tile, ssc)   # W_blk is sublane-tile aligned
            acc = acc + jnp.dot(lhs, w_ref[qh * Q + qw],
                                preferred_element_type=jnp.float32)

    # Conv bias + two-pass LayerNorm (divisor = true N), all in f32.
    # Padded columns of `y` are exactly 0 (zero weight columns + zero bias), so
    # the full-width sum already equals the true-column sum for the mean.
    y = acc + b_ref[...]
    inv_n = 1.0 / n_true
    mean = jnp.sum(y, axis=-1, keepdims=True) * inv_n
    d = y - mean
    if n_pad != n_true:
        lane = lax.broadcasted_iota(jnp.int32, (1, n_pad), 1)
        d = d * (lane < n_true).astype(jnp.float32)   # mask padded columns
    var = jnp.sum(d * d, axis=-1, keepdims=True) * inv_n
    y_hat = d * lax.rsqrt(var + eps)
    # gamma is zero in padded columns -> padded output columns are exactly 0.
    o_ref[0] = (y_hat * g_ref[...] + beta_ref[...]).astype(o_ref.dtype)


def overlap_patch_embed(x, conv_w, conv_b, ln_gamma, ln_beta, *,
                        patch_size, stride, eps=1e-5,
                        block_rows=2048, mxu_dtype=jnp.bfloat16):
    """Fused Conv2d(k=patch_size, stride, pad=k//2) + flatten + LayerNorm.

    x      : (B, C, H, W) NCHW        conv_w : (N, C, k, k) OIHW
    Returns (out (B, H_out*W_out, N), H_out, W_out) -- PyTorch module semantics.
    mxu_dtype: dtype for the MXU operands (default bf16); accumulation, LN math
               and the output stay in x's dtype / f32.
    """
    B, C, H, W = x.shape
    N = conv_w.shape[0]
    ks, s = patch_size, stride
    pad = ks // 2
    out_dtype = x.dtype

    H_out = (H + 2 * pad - ks) // s + 1
    W_out = (W + 2 * pad - ks) // s + 1
    Q = _cdiv(ks, s)                       # space-to-depth taps per spatial dim
    ssC = s * s * C                        # in-kernel contraction width
    N_pad = _round_up(N, 128)              # lane-dense output / weight columns

    in_dt = jnp.dtype(mxu_dtype) if mxu_dtype is not None else jnp.dtype(x.dtype)
    packing = max(1, 4 // in_dt.itemsize)
    sub_mult = 8 * packing                 # sublane tile of the MXU input dtype

    # Pad the W tile so the in-kernel (TH, W_blk, ssC) collapse stays
    # tile-aligned (free).  No-op for the usual Segformer widths.
    W_blk = _round_up(W_out, sub_mult)
    Wq = W_blk + Q - 1

    # Generation-aware VMEM budget (v7x: 64 MiB physical, v5e/v6e: 128 MiB).
    vmem_cap = None
    try:
        vmem_cap = int(pltpu.get_tpu_info().vmem_capacity_bytes)
    except Exception:
        vmem_cap = None
    if not vmem_cap:
        kind = ""
        try:
            kind = jax.devices()[0].device_kind.lower()
        except Exception:
            pass
        vmem_cap = (64 * 1024 * 1024 if ("v7" in kind or "7x" in kind)
                    else 128 * 1024 * 1024)
    vmem_budget = max(vmem_cap - 4 * 1024 * 1024, 16 * 1024 * 1024)

    def _plan(th):
        n_r = _cdiv(H_out, th)
        h_out_pad = n_r * th
        hq = h_out_pad + Q - 1
        m_tile = th * W_blk
        est = (2 * (_vmem_block_bytes((1, hq, Wq, ssC), in_dt)
                    + _vmem_block_bytes((Q * Q, ssC, N_pad), in_dt)
                    + 3 * _vmem_block_bytes((1, N_pad), jnp.float32)
                    + _vmem_block_bytes((1, m_tile, N_pad), out_dtype))
               + 6 * m_tile * N_pad * 4      # acc / LN temporaries
               + (1 << 20))
        return n_r, h_out_pad, hq, m_tile, est

    # Target ~block_rows matmul rows per grid step (big tiles amortize the
    # ~0.35us/step overhead); step TH down in sublane-sized decrements if the
    # VMEM estimate overflows (halving overshoots and wastes budget).
    TH = max(1, min(H_out, max(1, block_rows // W_blk)))
    n_r, H_out_pad, Hq, M_tile, vmem_est = _plan(TH)
    while TH > 1 and vmem_est > vmem_budget:
        TH = max(1, TH - 8) if TH > 8 else TH - 1
        n_r, H_out_pad, Hq, M_tile, vmem_est = _plan(TH)

    # ---- wrapper glue: cast FIRST, then pad + space-to-depth (one cheap pass).
    if jnp.dtype(x.dtype) != in_dt:
        x = x.astype(in_dt)
    pad_hi_h = Hq * s - H - pad
    pad_hi_w = Wq * s - W - pad
    x_nhwc = jnp.transpose(x, (0, 2, 3, 1))
    x_p = jnp.pad(x_nhwc, ((0, 0), (pad, pad_hi_h), (pad, pad_hi_w), (0, 0)))
    x_s2d = x_p.reshape(B, Hq, s, Wq, s, C)
    x_s2d = jnp.transpose(x_s2d, (0, 1, 3, 2, 4, 5)).reshape(B, Hq, Wq, ssC)

    # Conv weight (OIHW) -> zero-padded s2d grouping (Q*Q, s*s*C, N_pad); the
    # contraction dim is ordered (ph, pw, c) to match x_s2d's depth ordering.
    w = jnp.transpose(conv_w, (2, 3, 1, 0)).astype(in_dt)          # (k, k, C, N)
    w = jnp.zeros((Q * s, Q * s, C, N), in_dt).at[:ks, :ks].set(w)
    w = w.reshape(Q, s, Q, s, C, N)
    w = jnp.transpose(w, (0, 2, 1, 3, 4, 5)).reshape(Q * Q, ssC, N)
    if N_pad != N:
        w = jnp.pad(w, ((0, 0), (0, 0), (0, N_pad - N)))

    b2 = jnp.zeros((1, N_pad), jnp.float32).at[0, :N].set(
        conv_b.astype(jnp.float32))
    g2 = jnp.zeros((1, N_pad), jnp.float32).at[0, :N].set(       # ZERO padding
        ln_gamma.astype(jnp.float32))
    beta2 = jnp.zeros((1, N_pad), jnp.float32).at[0, :N].set(
        ln_beta.astype(jnp.float32))

    grid = (B, n_r)
    flops = 2 * B * n_r * M_tile * ssC * N_pad * Q * Q + 8 * B * n_r * M_tile * N_pad
    bytes_accessed = (x_s2d.size * x_s2d.dtype.itemsize
                      + w.size * w.dtype.itemsize
                      + 3 * N_pad * 4
                      + B * H_out_pad * W_blk * N_pad * jnp.dtype(out_dtype).itemsize)
    cost = pl.CostEstimate(flops=int(flops),
                           transcendentals=int(B * n_r * M_tile),
                           bytes_accessed=int(bytes_accessed))

    kernel = functools.partial(_overlap_patch_embed_kernel,
                               Q=Q, TH=TH, W_blk=W_blk, n_true=N, eps=eps)

    out = pl.pallas_call(
        kernel,
        out_shape=jax.ShapeDtypeStruct((B, H_out_pad * W_blk, N_pad), out_dtype),
        grid_spec=pltpu.PrefetchScalarGridSpec(
            num_scalar_prefetch=0,
            grid=grid,
            in_specs=[
                # Whole per-batch s2d image; constant block index along the
                # inner row-tile axis -> stays resident in VMEM.
                pl.BlockSpec((1, Hq, Wq, ssC), lambda b, r: (b, 0, 0, 0)),
                # Conv weight / bias / LN params: resident across the grid.
                pl.BlockSpec((Q * Q, ssC, N_pad), lambda b, r: (0, 0, 0)),
                pl.BlockSpec((1, N_pad), lambda b, r: (0, 0)),
                pl.BlockSpec((1, N_pad), lambda b, r: (0, 0)),
                pl.BlockSpec((1, N_pad), lambda b, r: (0, 0)),
            ],
            out_specs=pl.BlockSpec((1, M_tile, N_pad), lambda b, r: (b, r, 0)),
        ),
        compiler_params=pltpu.CompilerParams(
            dimension_semantics=("parallel", "parallel"),
            vmem_limit_bytes=int(min(max(vmem_est, 32 * 1024 * 1024),
                                     vmem_budget)),
        ),
        cost_estimate=cost,
    )(x_s2d, w, b2, g2, beta2)

    # Drop row/column/channel padding and flatten to (B, H_out*W_out, N).
    out = out.reshape(B, H_out_pad, W_blk, N_pad)[:, :H_out, :W_out, :N]
    out = out.reshape(B, H_out * W_out, N)
    return out, H_out, W_out


def _reference(x, conv_w, conv_b, ln_gamma, ln_beta, *, patch_size, stride,
               eps=1e-5):
    pad = patch_size // 2
    y = lax.conv_general_dilated(
        x, conv_w, window_strides=(stride, stride),
        padding=((pad, pad), (pad, pad)),
        dimension_numbers=("NCHW", "OIHW", "NCHW"))
    y = y + conv_b[None, :, None, None]
    B, N, Ho, Wo = y.shape
    y = jnp.transpose(y, (0, 2, 3, 1)).reshape(B, Ho * Wo, N)
    mean = jnp.mean(y, axis=-1, keepdims=True)
    var = jnp.mean((y - mean) ** 2, axis=-1, keepdims=True)
    y = (y - mean) * lax.rsqrt(var + eps)
    return y * ln_gamma + ln_beta, Ho, Wo


def _run_case(name, *, B, C, H, W, N, ks, s, mxu_dtype, atol, rtol, key):
    k_x, k_w, k_b = jax.random.split(key, 3)
    x = jax.random.normal(k_x, (B, C, H, W), dtype=jnp.float32)
    conv_w = 0.1 * jax.random.normal(k_w, (N, C, ks, ks), dtype=jnp.float32)
    conv_b = 0.1 * jax.random.normal(k_b, (N,), dtype=jnp.float32)
    gamma = jnp.ones((N,), jnp.float32)     # PyTorch LayerNorm default init
    beta = jnp.zeros((N,), jnp.float32)

    # Whole wrapper (cast + pad + s2d + pallas_call) lives in one jit.
    fwd = jax.jit(functools.partial(overlap_patch_embed,
                                    patch_size=ks, stride=s,
                                    mxu_dtype=mxu_dtype))
    out, h, w = fwd(x, conv_w, conv_b, gamma, beta)
    out = jax.block_until_ready(out)
    h, w = int(h), int(w)

    ref, h_ref, w_ref = _reference(
        x, conv_w, conv_b, gamma, beta, patch_size=ks, stride=s)

    assert (h, w) == (int(h_ref), int(w_ref)), name
    assert out.shape == (B, h * w, N), name
    assert jnp.allclose(out, ref, atol=atol, rtol=rtol), (
        name, float(jnp.max(jnp.abs(out - ref))))


if __name__ == "__main__":
    key = jax.random.PRNGKey(0)
    k1, k2, k3 = jax.random.split(key, 3)

    # Stage-1-like config: in_chans=3, patch 7, stride 4 (f32 MXU path, tight).
    _run_case("stage1_f32", B=2, C=3, H=32, W=32, N=32, ks=7, s=4,
              mxu_dtype=jnp.float32, atol=1e-4, rtol=1e-4, key=k1)
    # Stage-2-like config: patch 3, stride 2 (f32 MXU path, tight check).
    _run_case("stage2_f32", B=2, C=4, H=16, W=16, N=32, ks=3, s=2,
              mxu_dtype=jnp.float32, atol=1e-4, rtol=1e-4, key=k2)
    # Default bf16 MXU operands (halved HBM traffic), loose check.
    _run_case("stage2_bf16", B=2, C=4, H=16, W=16, N=32, ks=3, s=2,
              mxu_dtype=jnp.bfloat16, atol=5e-2, rtol=5e-2, key=k2)
    # embed_dim already a multiple of 128 (no lane mask / no N padding path).
    _run_case("n128_f32", B=1, C=4, H=16, W=16, N=128, ks=3, s=2,
              mxu_dtype=jnp.float32, atol=1e-4, rtol=1e-4, key=k3)

    print("KERNEL_OK")
</pallas_src>

<mosaic_0001>
module attributes {stable_mosaic.version = 11 : i64} {
  func.func @_overlap_patch_embed_kernel(%arg0: i32, %arg1: i32, %arg2: memref<1x9x9x48xf32, #tpu.memory_space<vmem>>, %arg3: memref<4x48x128xf32, #tpu.memory_space<vmem>>, %arg4: memref<1x128xf32, #tpu.memory_space<vmem>>, %arg5: memref<1x128xf32, #tpu.memory_space<vmem>>, %arg6: memref<1x128xf32, #tpu.memory_space<vmem>>, %arg7: memref<1x64x128xf32, #tpu.memory_space<vmem>>) attributes {dimension_semantics = [#tpu.dimension_semantics<parallel>, #tpu.dimension_semantics<parallel>], iteration_bounds = array<i64: 2, 1>, scalar_prefetch = 0 : i64, scratch_operands = 0 : i64, tpu.core_type = #tpu.core_type<tc>, window_params = [{transform_indices = @transform_0, window_bounds = array<i64: 1, 9, 9, 48>}, {pipeline_mode = #tpu.pipeline_mode<synchronous>, transform_indices = @transform_1, window_bounds = array<i64: 4, 48, 128>}, {pipeline_mode = #tpu.pipeline_mode<synchronous>, transform_indices = @transform_2, window_bounds = array<i64: 1, 128>}, {pipeline_mode = #tpu.pipeline_mode<synchronous>, transform_indices = @transform_3, window_bounds = array<i64: 1, 128>}, {pipeline_mode = #tpu.pipeline_mode<synchronous>, transform_indices = @transform_4, window_bounds = array<i64: 1, 128>}, {transform_indices = @transform_5, window_bounds = array<i64: 1, 64, 128>}]} {
    %c8_i32 = arith.constant 8 : i32
    %0 = arith.muli %arg1, %c8_i32 : i32
    %cst = arith.constant 0.000000e+00 : f32
    %1 = vector.broadcast %cst : f32 to vector<64x128xf32>
    %c0_i32 = arith.constant 0 : i32
    %2 = arith.addi %0, %c0_i32 : i32
    %c0 = arith.constant 0 : index
    %3 = arith.index_cast %2 : i32 to index
    %c0_0 = arith.constant 0 : index
    %c0_1 = arith.constant 0 : index
    %4 = vector.load %arg2[%c0, %3, %c0_0, %c0_1] : memref<1x9x9x48xf32, #tpu.memory_space<vmem>>, vector<1x8x8x48xf32>
    %5 = vector.shape_cast %4 : vector<1x8x8x48xf32> to vector<8x8x48xf32>
    %6 = vector.shape_cast %5 : vector<8x8x48xf32> to vector<64x48xf32>
    %c0_2 = arith.constant 0 : index
    %c0_3 = arith.constant 0 : index
    %c0_4 = arith.constant 0 : index
    %7 = vector.load %arg3[%c0_2, %c0_3, %c0_4] : memref<4x48x128xf32, #tpu.memory_space<vmem>>, vector<1x48x128xf32>
    %8 = vector.shape_cast %7 : vector<1x48x128xf32> to vector<48x128xf32>
    %cst_5 = arith.constant dense<0.000000e+00> : vector<64x128xf32>
    %9 = tpu.matmul %6, %8, %cst_5 {dimension_numbers = #tpu.dot_dimension_numbers<[1], [0], [0], [1], [0, 0, 1, 1], [], []>} : vector<64x48xf32>, vector<48x128xf32>, vector<64x128xf32> -> vector<64x128xf32>
    %10 = arith.addf %1, %9 : vector<64x128xf32>
    %c0_i32_6 = arith.constant 0 : i32
    %11 = arith.addi %0, %c0_i32_6 : i32
    %c0_7 = arith.constant 0 : index
    %12 = arith.index_cast %11 : i32 to index
    %c1 = arith.constant 1 : index
    %c0_8 = arith.constant 0 : index
    %13 = vector.load %arg2[%c0_7, %12, %c1, %c0_8] : memref<1x9x9x48xf32, #tpu.memory_space<vmem>>, vector<1x8x8x48xf32>
    %14 = vector.shape_cast %13 : vector<1x8x8x48xf32> to vector<8x8x48xf32>
    %15 = vector.shape_cast %14 : vector<8x8x48xf32> to vector<64x48xf32>
    %c1_9 = arith.constant 1 : index
    %c0_10 = arith.constant 0 : index
    %c0_11 = arith.constant 0 : index
    %16 = vector.load %arg3[%c1_9, %c0_10, %c0_11] : memref<4x48x128xf32, #tpu.memory_space<vmem>>, vector<1x48x128xf32>
    %17 = vector.shape_cast %16 : vector<1x48x128xf32> to vector<48x128xf32>
    %cst_12 = arith.constant dense<0.000000e+00> : vector<64x128xf32>
    %18 = tpu.matmul %15, %17, %cst_12 {dimension_numbers = #tpu.dot_dimension_numbers<[1], [0], [0], [1], [0, 0, 1, 1], [], []>} : vector<64x48xf32>, vector<48x128xf32>, vector<64x128xf32> -> vector<64x128xf32>
    %19 = arith.addf %10, %18 : vector<64x128xf32>
    %c1_i32 = arith.constant 1 : i32
    %20 = arith.addi %0, %c1_i32 : i32
    %c0_13 = arith.constant 0 : index
    %21 = arith.index_cast %20 : i32 to index
    %c0_14 = arith.constant 0 : index
    %c0_15 = arith.constant 0 : index
    %22 = vector.load %arg2[%c0_13, %21, %c0_14, %c0_15] : memref<1x9x9x48xf32, #tpu.memory_space<vmem>>, vector<1x8x8x48xf32>
    %23 = vector.shape_cast %22 : vector<1x8x8x48xf32> to vector<8x8x48xf32>
    %24 = vector.shape_cast %23 : vector<8x8x48xf32> to vector<64x48xf32>
    %c2 = arith.constant 2 : index
    %c0_16 = arith.constant 0 : index
    %c0_17 = arith.constant 0 : index
    %25 = vector.load %arg3[%c2, %c0_16, %c0_17] : memref<4x48x128xf32, #tpu.memory_space<vmem>>, vector<1x48x128xf32>
    %26 = vector.shape_cast %25 : vector<1x48x128xf32> to vector<48x128xf32>
    %cst_18 = arith.constant dense<0.000000e+00> : vector<64x128xf32>
    %27 = tpu.matmul %24, %26, %cst_18 {dimension_numbers = #tpu.dot_dimension_numbers<[1], [0], [0], [1], [0, 0, 1, 1], [], []>} : vector<64x48xf32>, vector<48x128xf32>, vector<64x128xf32> -> vector<64x128xf32>
    %28 = arith.addf %19, %27 : vector<64x128xf32>
    %c1_i32_19 = arith.constant 1 : i32
    %29 = arith.addi %0, %c1_i32_19 : i32
    %c0_20 = arith.constant 0 : index
    %30 = arith.index_cast %29 : i32 to index
    %c1_21 = arith.constant 1 : index
    %c0_22 = arith.constant 0 : index
    %31 = vector.load %arg2[%c0_20, %30, %c1_21, %c0_22] : memref<1x9x9x48xf32, #tpu.memory_space<vmem>>, vector<1x8x8x48xf32>
    %32 = vector.shape_cast %31 : vector<1x8x8x48xf32> to vector<8x8x48xf32>
    %33 = vector.shape_cast %32 : vector<8x8x48xf32> to vector<64x48xf32>
    %c3 = arith.constant 3 : index
    %c0_23 = arith.constant 0 : index
    %c0_24 = arith.constant 0 : index
    %34 = vector.load %arg3[%c3, %c0_23, %c0_24] : memref<4x48x128xf32, #tpu.memory_space<vmem>>, vector<1x48x128xf32>
    %35 = vector.shape_cast %34 : vector<1x48x128xf32> to vector<48x128xf32>
    %cst_25 = arith.constant dense<0.000000e+00> : vector<64x128xf32>
    %36 = tpu.matmul %33, %35, %cst_25 {dimension_numbers = #tpu.dot_dimension_numbers<[1], [0], [0], [1], [0, 0, 1, 1], [], []>} : vector<64x48xf32>, vector<48x128xf32>, vector<64x128xf32> -> vector<64x128xf32>
    %37 = arith.addf %28, %36 : vector<64x128xf32>
    %c0_26 = arith.constant 0 : index
    %c0_27 = arith.constant 0 : index
    %38 = vector.load %arg4[%c0_26, %c0_27] : memref<1x128xf32, #tpu.memory_space<vmem>>, vector<1x128xf32>
    %39 = vector.broadcast %38 : vector<1x128xf32> to vector<64x128xf32>
    %40 = arith.addf %37, %39 : vector<64x128xf32>
    %cst_28 = arith.constant dense<0.000000e+00> : vector<64xf32>
    %41 = vector.multi_reduction <add>, %40, %cst_28 [1] : vector<64x128xf32> to vector<64xf32>
    %42 = vector.shape_cast %41 : vector<64xf32> to vector<64x1xf32>
    %cst_29 = arith.constant 3.125000e-02 : f32
    %43 = vector.broadcast %cst_29 : f32 to vector<64x1xf32>
    %44 = arith.mulf %42, %43 : vector<64x1xf32>
    %45 = vector.broadcast %44 : vector<64x1xf32> to vector<64x128xf32>
    %46 = arith.subf %40, %45 : vector<64x128xf32>
    %47 = tpu.iota {dimensions = array<i32: 1>} : vector<1x128xi32>
    %c32_i32 = arith.constant 32 : i32
    %48 = vector.broadcast %c32_i32 : i32 to vector<1x128xi32>
    %49 = arith.cmpi slt, %47, %48 : vector<1x128xi32>
    %50 = arith.extui %49 : vector<1x128xi1> to vector<1x128xi32>
    %51 = arith.sitofp %50 : vector<1x128xi32> to vector<1x128xf32>
    %52 = vector.broadcast %51 : vector<1x128xf32> to vector<64x128xf32>
    %53 = arith.mulf %46, %52 : vector<64x128xf32>
    %54 = arith.mulf %53, %53 : vector<64x128xf32>
    %cst_30 = arith.constant dense<0.000000e+00> : vector<64xf32>
    %55 = vector.multi_reduction <add>, %54, %cst_30 [1] : vector<64x128xf32> to vector<64xf32>
    %56 = vector.shape_cast %55 : vector<64xf32> to vector<64x1xf32>
    %cst_31 = arith.constant 3.125000e-02 : f32
    %57 = vector.broadcast %cst_31 : f32 to vector<64x1xf32>
    %58 = arith.mulf %56, %57 : vector<64x1xf32>
    %cst_32 = arith.constant 9.99999974E-6 : f32
    %59 = vector.broadcast %cst_32 : f32 to vector<64x1xf32>
    %60 = arith.addf %58, %59 : vector<64x1xf32>
    %61 = math.rsqrt %60 : vector<64x1xf32>
    %62 = vector.broadcast %61 : vector<64x1xf32> to vector<64x128xf32>
    %63 = arith.mulf %53, %62 : vector<64x128xf32>
    %c0_33 = arith.constant 0 : index
    %c0_34 = arith.constant 0 : index
    %64 = vector.load %arg5[%c0_33, %c0_34] : memref<1x128xf32, #tpu.memory_space<vmem>>, vector<1x128xf32>
    %65 = vector.broadcast %64 : vector<1x128xf32> to vector<64x128xf32>
    %66 = arith.mulf %63, %65 : vector<64x128xf32>
    %c0_35 = arith.constant 0 : index
    %c0_36 = arith.constant 0 : index
    %67 = vector.load %arg6[%c0_35, %c0_36] : memref<1x128xf32, #tpu.memory_space<vmem>>, vector<1x128xf32>
    %68 = vector.broadcast %67 : vector<1x128xf32> to vector<64x128xf32>
    %69 = arith.addf %66, %68 : vector<64x128xf32>
    %c0_37 = arith.constant 0 : index
    %c0_38 = arith.constant 0 : index
    %c0_39 = arith.constant 0 : index
    %70 = vector.load %arg7[%c0_37, %c0_38, %c0_39] : memref<1x64x128xf32, #tpu.memory_space<vmem>>, vector<1x64x128xf32>
    %71 = vector.shape_cast %70 : vector<1x64x128xf32> to vector<64x128xf32>
    %72 = vector.shape_cast %69 : vector<64x128xf32> to vector<1x64x128xf32>
    tpu.vector_store %arg7[%c0_37, %c0_38, %c0_39], %72 {strides = array<i32>} : memref<1x64x128xf32, #tpu.memory_space<vmem>>, vector<1x64x128xf32>,
    return
  }
  func.func @transform_0(%arg0: i32, %arg1: i32) -> (i32, i32, i32, i32) {
    %c0_i32 = arith.constant 0 : i32
    %c0_i32_0 = arith.constant 0 : i32
    %c0_i32_1 = arith.constant 0 : i32
    %c0_i32_2 = arith.constant 0 : i32
    return %arg0, %c0_i32, %c0_i32_0, %c0_i32_1 : i32, i32, i32, i32
  }
  func.func @transform_1(%arg0: i32, %arg1: i32) -> (i32, i32, i32) {
    %c0_i32 = arith.constant 0 : i32
    %c0_i32_0 = arith.constant 0 : i32
    %c0_i32_1 = arith.constant 0 : i32
    %c0_i32_2 = arith.constant 0 : i32
    return %c0_i32, %c0_i32_0, %c0_i32_1 : i32, i32, i32
  }
  func.func @transform_2(%arg0: i32, %arg1: i32) -> (i32, i32) {
    %c0_i32 = arith.constant 0 : i32
    %c0_i32_0 = arith.constant 0 : i32
    %c0_i32_1 = arith.constant 0 : i32
    return %c0_i32, %c0_i32_0 : i32, i32
  }
  func.func @transform_3(%arg0: i32, %arg1: i32) -> (i32, i32) {
    %c0_i32 = arith.constant 0 : i32
    %c0_i32_0 = arith.constant 0 : i32
    %c0_i32_1 = arith.constant 0 : i32
    return %c0_i32, %c0_i32_0 : i32, i32
  }
  func.func @transform_4(%arg0: i32, %arg1: i32) -> (i32, i32) {
    %c0_i32 = arith.constant 0 : i32
    %c0_i32_0 = arith.constant 0 : i32
    %c0_i32_1 = arith.constant 0 : i32
    return %c0_i32, %c0_i32_0 : i32, i32
  }
  func.func @transform_5(%arg0: i32, %arg1: i32) -> (i32, i32, i32) {
    %c0_i32 = arith.constant 0 : i32
    %c0_i32_0 = arith.constant 0 : i32
    return %arg0, %arg1, %c0_i32 : i32, i32, i32
  }
}

</mosaic_0001>

<llo_original>
// kernel: overlap_patch_embed.1
$region0: #{overlap_patch_embed.1}
  #allocation0 [shape = 'u32[]', space=smem, size = 0x4, offset = 0x4, fixed_abs, tag = 'smem constant byte address 0x4 - core index']
  #allocation1 [shape = 'u32[144,128]{1,0:T(1,128)}', space=vmem, size = 0x12000, scoped, tag = 'internal scratch']
  %s0 = inlined_call_operand.vmem [shape: f32[2,9,9,48], index: 0, kind: input, shape index: {}]
  %s1 = inlined_call_operand.vmem [shape: f32[4,48,128], index: 1, kind: input, shape index: {}]
  %s2 = inlined_call_operand.vmem [shape: f32[1,128], index: 2, kind: input, shape index: {}]
  %s3 = inlined_call_operand.vmem [shape: f32[1,128], index: 3, kind: input, shape index: {}]
  %s4 = inlined_call_operand.vmem [shape: f32[1,128], index: 4, kind: input, shape index: {}]
  %s5 = inlined_call_operand.vmem [shape: f32[2,64,128], index: 5, kind: output, shape index: {}]
  %s6 = sld [smem:[#allocation0]]
  $region53: #{overlap_patch_embed.1} parent=0
    _
  %s8 = ssub.s32 1, %s6
  %s9 = scalar_select 0, %s8, %s6
  loop: start=0, step=1, limit=4
  $region2: #{overlap_patch_embed.1} parent=0 // loop_pre_header
    _
  $region3: #{overlap_patch_embed.1} parent=0 // loop_header
    %s11 = sphi 0, %s15
    %p12 = scmp.ge.s32.totalorder %s11, 4
    %s18 = sphi 0, %s30
    %s19 = sphi 0, %s26
    %s20 = sphi 0, %s18
    %s21 = sphi 0, %s19
    %s22 = sphi 0, %s20
    %s23 = sphi 0, %s21
    %s33 = sphi 0, %s35
    %s36 = sphi 0, %s33
    %s37 = sphi 0, %s36
    %s53 = sphi 0, %s37
    %s57 = sphi 0, %s57
    %s59 = sphi 0, %s57
    %s60 = sphi 0, %s59
    %s74 = sphi 0, %s60
    %s78 = sphi 0, %s78
    %s80 = sphi 0, %s78
    %s81 = sphi 0, %s80
    %s95 = sphi 0, %s81
    %s99 = sphi 0, %s99
    %s101 = sphi 0, %s99
    %s102 = sphi 0, %s101
    %s116 = sphi 0, %s102
    %s120 = sphi 0, %s120
    %s122 = sphi 0, %s120
    %s123 = sphi 0, %s122
    %s137 = sphi 0, %s123
    %s145 = sphi 0, %s147
    %s148 = sphi 0, %s145
    %s149 = sphi 0, %s148
    %s165 = sphi 0, %s149
  $region4: #{overlap_patch_embed.1} parent=0 // loop_header_branch
    %14 = sbr.rel (%p12) target = $region8
  $region5: #{overlap_patch_embed.1} parent=0 // loop_body
    %s16 = ssub.s32 %s11, 1
    %s17 = ssub.s32 %s11, 2
    %s24 = sadd.s32 1, %s19
    %p25 = scmp.ge.s32.totalorder %s24, 1
    %s26 = scalar_select %p25, 0, %s24
    %s27 = sadd.s32 1, %s18
    %s28 = scalar_select %p25, %s27, %s18
    %p29 = scmp.ge.s32.totalorder %s28, 2
    %s30 = scalar_select %p29, 0, %s28
    %s31 = ssub.s32 %s18, %s30
    %p32 = scmp.eq.s32.totalorder %s31, 0
    %s34 = sadd.s32 %s33, 1
    %s35 = scalar_select %p32, %s33, %s34
    %p38 = pneg %p32
    %p39 = scmp.eq.s32.totalorder %s11, 1
    %p40 = por %p38, %p39
    %p41 = scmp.ne.s32.totalorder %s33, %s36
    %p42 = scmp.eq.s32.totalorder %s11, 0
    %p43 = por %p41, %p42
    %p44 = scmp.ne.s32.totalorder %s33, %s36
    %p45 = scmp.eq.s32.totalorder %s16, 1
    %p46 = por %p44, %p45
    %p47 = scmp.ne.s32.totalorder %s36, %s37
    %p48 = scmp.eq.s32.totalorder %s16, 0
    %p49 = por %p47, %p48
    %p50 = scmp.ne.s32.totalorder %s36, %s37
    %p51 = scmp.eq.s32.totalorder %s17, 1
    %p52 = por %p50, %p51
    %p54 = scmp.ne.s32.totalorder %s37, %s53
    %p55 = scmp.eq.s32.totalorder %s17, 0
    %p56 = por %p54, %p55
    %s58 = sadd.s32 %s57, 1
    %p61 = scmp.eq.s32.totalorder %s11, 1
    %p62 = scmp.ne.s32.totalorder %s57, %s59
    %p63 = scmp.eq.s32.totalorder %s11, 0
    %p64 = por %p62, %p63
    %p65 = scmp.ne.s32.totalorder %s57, %s59
    %p66 = scmp.eq.s32.totalorder %s16, 1
    %p67 = por %p65, %p66
    %p68 = scmp.ne.s32.totalorder %s59, %s60
    %p69 = scmp.eq.s32.totalorder %s16, 0
    %p70 = por %p68, %p69
    %p71 = scmp.ne.s32.totalorder %s59, %s60
    %p72 = scmp.eq.s32.totalorder %s17, 1
    %p73 = por %p71, %p72
    %p75 = scmp.ne.s32.totalorder %s60, %s74
    %p76 = scmp.eq.s32.totalorder %s17, 0
    %p77 = por %p75, %p76
    %s79 = sadd.s32 %s78, 1
    %p82 = scmp.eq.s32.totalorder %s11, 1
    %p83 = scmp.ne.s32.totalorder %s78, %s80
    %p84 = scmp.eq.s32.totalorder %s11, 0
    %p85 = por %p83, %p84
    %p86 = scmp.ne.s32.totalorder %s78, %s80
    %p87 = scmp.eq.s32.totalorder %s16, 1
    %p88 = por %p86, %p87
    %p89 = scmp.ne.s32.totalorder %s80, %s81
    %p90 = scmp.eq.s32.totalorder %s16, 0
    %p91 = por %p89, %p90
    %p92 = scmp.ne.s32.totalorder %s80, %s81
    %p93 = scmp.eq.s32.totalorder %s17, 1
    %p94 = por %p92, %p93
    %p96 = scmp.ne.s32.totalorder %s81, %s95
    %p97 = scmp.eq.s32.totalorder %s17, 0
    %p98 = por %p96, %p97
    %s100 = sadd.s32 %s99, 1
    %p103 = scmp.eq.s32.totalorder %s11, 1
    %p104 = scmp.ne.s32.totalorder %s99, %s101
    %p105 = scmp.eq.s32.totalorder %s11, 0
    %p106 = por %p104, %p105
    %p107 = scmp.ne.s32.totalorder %s99, %s101
    %p108 = scmp.eq.s32.totalorder %s16, 1
    %p109 = por %p107, %p108
    %p110 = scmp.ne.s32.totalorder %s101, %s102
    %p111 = scmp.eq.s32.totalorder %s16, 0
    %p112 = por %p110, %p111
    %p113 = scmp.ne.s32.totalorder %s101, %s102
    %p114 = scmp.eq.s32.totalorder %s17, 1
    %p115 = por %p113, %p114
    %p117 = scmp.ne.s32.totalorder %s102, %s116
    %p118 = scmp.eq.s32.totalorder %s17, 0
    %p119 = por %p117, %p118
    %s121 = sadd.s32 %s120, 1
    %p124 = scmp.eq.s32.totalorder %s11, 1
    %p125 = scmp.ne.s32.totalorder %s120, %s122
    %p126 = scmp.eq.s32.totalorder %s11, 0
    %p127 = por %p125, %p126
    %p128 = scmp.ne.s32.totalorder %s120, %s122
    %p129 = scmp.eq.s32.totalorder %s16, 1
    %p130 = por %p128, %p129
    %p131 = scmp.ne.s32.totalorder %s122, %s123
    %p132 = scmp.eq.s32.totalorder %s16, 0
    %p133 = por %p131, %p132
    %p134 = scmp.ne.s32.totalorder %s122, %s123
    %p135 = scmp.eq.s32.totalorder %s17, 1
    %p136 = por %p134, %p135
    %p138 = scmp.ne.s32.totalorder %s123, %s137
    %p139 = scmp.eq.s32.totalorder %s17, 0
    %p140 = por %p138, %p139
    %s141 = ssub.s32 %s18, %s30
    %s142 = ssub.s32 %s19, %s26
    %s143 = sor.u32 %s141, %s142
    %p144 = scmp.eq.s32.totalorder %s143, 0
    %s146 = sadd.s32 %s145, 1
    %s147 = scalar_select %p144, %s145, %s146
    %p150 = pneg %p144
    %p151 = scmp.eq.s32.totalorder %s11, 1
    %p152 = por %p150, %p151
    %p153 = scmp.ne.s32.totalorder %s145, %s148
    %p154 = scmp.eq.s32.totalorder %s11, 0
    %p155 = por %p153, %p154
    %p156 = scmp.ne.s32.totalorder %s145, %s148
    %p157 = scmp.eq.s32.totalorder %s16, 1
    %p158 = por %p156, %p157
    %p159 = scmp.ne.s32.totalorder %s148, %s149
    %p160 = scmp.eq.s32.totalorder %s16, 0
    %p161 = por %p159, %p160
    %p162 = scmp.ne.s32.totalorder %s148, %s149
    %p163 = scmp.eq.s32.totalorder %s17, 1
    %p164 = por %p162, %p163
    %p166 = scmp.ne.s32.totalorder %s149, %s165
    %p167 = scmp.eq.s32.totalorder %s17, 0
    %p168 = por %p166, %p167
    %p169 = scmp.le.s32.totalorder 1, %s11
    %p170 = scmp.lt.s32.totalorder %s11, 3
    %p171 = pnand %p169, %p170
    %p172 = pneg %p171
    // Predicated region
    $region9: #{overlap_patch_embed.1} parent=5 // pred_check
      _
    $region10: #{overlap_patch_embed.1} parent=5 // pred_check_branch
      %174 = sbr.rel (%p171) target = $region12
    $region11: #{overlap_patch_embed.1} parent=5 // pred_region
      %s175 = ssub.s32 %s11, 1
      // Predicated region
      $region13: #{overlap_patch_embed.1} parent=11 // pred_check
        %p176 = pneg %p70
      $region14: #{overlap_patch_embed.1} parent=11 // pred_check_branch
        %178 = sbr.rel (%p176) target = $region16
      $region15: #{overlap_patch_embed.1} parent=11 // pred_region
        _
      $region16: #{overlap_patch_embed.1} parent=11 // pred_fallthru
        _
      // Predicated region
      $region17: #{overlap_patch_embed.1} parent=11 // pred_check
        %p179 = pneg %p91
      $region18: #{overlap_patch_embed.1} parent=11 // pred_check_branch
        %181 = sbr.rel (%p179) target = $region20
      $region19: #{overlap_patch_embed.1} parent=11 // pred_region
        _
      $region20: #{overlap_patch_embed.1} parent=11 // pred_fallthru
        _
      // Predicated region
      $region21: #{overlap_patch_embed.1} parent=11 // pred_check
        %p182 = pneg %p112
      $region22: #{overlap_patch_embed.1} parent=11 // pred_check_branch
        %184 = sbr.rel (%p182) target = $region24
      $region23: #{overlap_patch_embed.1} parent=11 // pred_region
        _
      $region24: #{overlap_patch_embed.1} parent=11 // pred_fallthru
        _
      // Predicated region
      $region25: #{overlap_patch_embed.1} parent=11 // pred_check
        %p185 = pneg %p133
      $region26: #{overlap_patch_embed.1} parent=11 // pred_check_branch
        %187 = sbr.rel (%p185) target = $region28
      $region27: #{overlap_patch_embed.1} parent=11 // pred_region
        _
      $region28: #{overlap_patch_embed.1} parent=11 // pred_fallthru
        _
    $region12: #{overlap_patch_embed.1} parent=5 // pred_fallthru
      _
    %p188 = scmp.lt.s32.totalorder %s11, 2
    // Predicated region
    $region29: #{overlap_patch_embed.1} parent=5 // pred_check
      %p189 = pneg %p188
    $region30: #{overlap_patch_embed.1} parent=5 // pred_check_branch
      %191 = sbr.rel (%p189) target = $region32
    $region31: #{overlap_patch_embed.1} parent=5 // pred_region
      // Predicated region
      $region33: #{overlap_patch_embed.1} parent=31 // pred_check
        %p192 = pneg %p43
      $region34: #{overlap_patch_embed.1} parent=31 // pred_check_branch
        %194 = sbr.rel (%p192) target = $region36
      $region35: #{overlap_patch_embed.1} parent=31 // pred_region
        %p195 = scmp.lt.s32.totalorder %s18, 1
        %s196 = scalar_select %p195, %s18, 1
        %s197 = smul.addr %s196, 18
        %s198 = smul.addr %s197, 8
        %s199 = scalar_lea.vmem %s0, %s198
      $region36: #{overlap_patch_embed.1} parent=31 // pred_fallthru
        _
    $region32: #{overlap_patch_embed.1} parent=5 // pred_fallthru
      _
    %p200 = scmp.le.s32.totalorder 1, %s11
    %p201 = scmp.lt.s32.totalorder %s11, 3
    %p202 = pnand %p200, %p201
    %p203 = pneg %p202
    // Predicated region
    $region37: #{overlap_patch_embed.1} parent=5 // pred_check
      _
    $region38: #{overlap_patch_embed.1} parent=5 // pred_check_branch
      %205 = sbr.rel (%p202) target = $region40
    $region39: #{overlap_patch_embed.1} parent=5 // pred_region
      %s206 = ssub.s32 %s11, 1
      %p207 = scmp.lt.s32.totalorder %s20, 1
      %s208 = scalar_select %p207, %s20, 1
      %s209 = smul.addr %s208, 18
      %s210 = smul.addr %s209, 8
      %s211 = scalar_lea.vmem %s0, %s210
      %p212 = pneg %p49
      %p213 = pneg %p46
      %p214 = pneg %p70
      %p215 = pneg %p67
      %p216 = pneg %p91
      %p217 = pneg %p88
      %p218 = pneg %p112
      %p219 = pneg %p109
      %p220 = pneg %p133
      %p221 = pneg %p130
      %p222 = pneg %p161
      %p223 = pneg %p158
      %s224 = smul.u32 8, %s21
      %p225 = scmp.lt.s32.totalorder %s20, 1
      %s226 = scalar_select %p225, %s20, 1
      %p227 = scmp.lt.s32.totalorder %s224, 7
      %s228 = scalar_select %p227, %s224, 7
      %s229 = smul.addr %s226, 8
      %s230 = sadd.s32 %s228, %s229
      %s231 = smul.addr %s230, 8
      %s232 = scalar_lea.vmem %s5, %s231
      %p233 = scmp.lt.s32.totalorder %s20, 1
      %s234 = scalar_select %p233, %s20, 1
      %s235 = smul.addr %s234, 18
      %s236 = smul.addr %s235, 8
      %s237 = scalar_lea.vmem %s0, %s236
      %s238 = smul.u32 8, %s21
      %p239 = scmp.lt.s32.totalorder %s20, 1
      %s240 = scalar_select %p239, %s20, 1
      %p241 = scmp.lt.s32.totalorder %s238, 7
      %s242 = scalar_select %p241, %s238, 7
      %s243 = smul.addr %s240, 8
      %s244 = sadd.s32 %s242, %s243
      %s245 = smul.addr %s244, 8
      %s246 = scalar_lea.vmem %s5, %s245
      %s247 = smul.u32 8, %s21
      %s248 = smul.u32 %s21, 8
      %s249 = smul.u32 %s248, 16
      %s250 = scalar_lea.vmem %s237, %s249
      %v251 = vld [vmem:[%s250] sm:$0xff]
      %v252 = vld [vmem:[%s250 + $0x10] sm:$0xff]
      %v253 = vld [vmem:[%s250 + $0x20] sm:$0xff]
      %v254 = vld [vmem:[%s250 + $0x30] sm:$0xff]
      %v255 = vld [vmem:[%s250 + $0x40] sm:$0xff]
      %v256 = vld [vmem:[%s250 + $0x50] sm:$0xff]
      %v257 = vld [vmem:[%s250 + $0x60] sm:$0xff]
      %v258 = vld [vmem:[%s250 + $0x70] sm:$0xff]
      %v259 = vld [vmem:[%s1] sm:$0xff]
      %v260 = vld [vmem:[%s1 + $0x8] sm:$0xff]
      %v261 = vld [vmem:[%s1 + $0x10] sm:$0xff]
      %v262 = vld [vmem:[%s1 + $0x18] sm:$0xff]
      %v263 = vld [vmem:[%s1 + $0x20] sm:$0xff]
      %v264 = vld [vmem:[%s1 + $0x28] sm:$0xff]
      %v265 = vld [vmem:[%s250 + $0x1] sm:$0xff]
      %v266 = vld [vmem:[%s250 + $0x11] sm:$0xff]
      %v267 = vld [vmem:[%s250 + $0x21] sm:$0xff]
      %v268 = vld [vmem:[%s250 + $0x31] sm:$0xff]
      %v269 = vld [vmem:[%s250 + $0x41] sm:$0xff]
      %v270 = vld [vmem:[%s250 + $0x51] sm:$0xff]
      %v271 = vld [vmem:[%s250 + $0x61] sm:$0xff]
      %v272 = vld [vmem:[%s250 + $0x71] sm:$0xff]
      %s273 = scalar_lea.vmem %s1, 48
      %v274 = vld [vmem:[%s273] sm:$0xff]
      %v275 = vld [vmem:[%s273 + $0x8] sm:$0xff]
      %v276 = vld [vmem:[%s273 + $0x10] sm:$0xff]
      %v277 = vld [vmem:[%s273 + $0x18] sm:$0xff]
      %v278 = vld [vmem:[%s273 + $0x20] sm:$0xff]
      %v279 = vld [vmem:[%s273 + $0x28] sm:$0xff]
      %vm280 = vcmask 392192
      %v282 = vsel %vm280, %v265, 0
      %v285 = vsel %vm280, %v266, 0
      %v288 = vsel %vm280, %v267, 0
      %v291 = vsel %vm280, %v268, 0
      %v294 = vsel %vm280, %v269, 0
      %v297 = vsel %vm280, %v270, 0
      %v300 = vsel %vm280, %v271, 0
      %v303 = vsel %vm280, %v272, 0
      %305 = vmatprep.subr.mxu0 0.0
      %306 = vmatpush1.msra.mxu0 0.0
      %307 = vmatprep.subr.mxu0 0.0
      %308 = vmatpush1.msra.mxu0 0.0
      %309 = vmatprep.subr.mxu0 0.0
      %310 = vmatpush1.msra.mxu0 0.0
      %311 = vmatprep.subr.mxu0 0.0
      %312 = vmatpush1.msra.mxu0 0.0
      %313 = vmatprep.subr.mxu0 0.0
      %314 = vmatpush1.msra.mxu0 0.0
      %315 = vmatprep.subr.mxu0 0.0
      %316 = vmatpush1.msra.mxu0 0.0
      %317 = vmatprep.subr.mxu0 0.0
      %318 = vmatpush1.msra.mxu0 0.0
      %319 = vmatprep.subr.mxu0 0.0
      %320 = vmatpush1.msra.mxu0 0.0
      %321 = vmatprep.subr.mxu0 0.0
      %322 = vmatpush1.msra.mxu0 0.0
      %323 = vmatprep.subr.mxu0 0.0
      %324 = vmatpush1.msra.mxu0 0.0
      %325 = vmatprep.subr.mxu0 0.0
      %326 = vmatpush1.msra.mxu0 %v279
      %327 = vmatprep.subr.mxu0 0.0
      %328 = vmatpush1.msra.mxu0 %v278
      %329 = vmatprep.subr.mxu0 0.0
      %330 = vmatpush1.msra.mxu0 %v277
      %331 = vmatprep.subr.mxu0 0.0
      %332 = vmatpush1.msra.mxu0 %v276
      %333 = vmatprep.subr.mxu0 0.0
      %334 = vmatpush1.msra.mxu0 %v275
      %335 = vmatprep.subr.mxu0 0.0
      %336 = vmatpush1.msra.mxu0 %v274
      %337 = vmatprep.subr.mxu0 0.0
      %338 = vmatpush2.msra.mxu0 0.0
      %339 = vmatprep.subr.mxu0 0.0
      %340 = vmatpush2.msra.mxu0 0.0
      %341 = vmatprep.subr.mxu0 0.0
      %342 = vmatpush2.msra.mxu0 0.0
      %343 = vmatprep.subr.mxu0 0.0
      %344 = vmatpush2.msra.mxu0 0.0
      %345 = vmatprep.subr.mxu0 0.0
      %346 = vmatpush2.msra.mxu0 0.0
      %347 = vmatprep.subr.mxu0 0.0
      %348 = vmatpush2.msra.mxu0 0.0
      %349 = vmatprep.subr.mxu0 0.0
      %350 = vmatpush2.msra.mxu0 0.0
      %351 = vmatprep.subr.mxu0 0.0
      %352 = vmatpush2.msra.mxu0 0.0
      %353 = vmatprep.subr.mxu0 0.0
      %354 = vmatpush2.msra.mxu0 0.0
      %355 = vmatprep.subr.mxu0 0.0
      %356 = vmatpush2.msra.mxu0 0.0
      %357 = vmatprep.subr.mxu0 0.0
      %358 = vmatpush2.msra.mxu0 0.0
      %359 = vmatprep.subr.mxu0 0.0
      %360 = vmatpush2.msra.mxu0 0.0
      %361 = vmatprep.subr.mxu0 0.0
      %362 = vmatpush2.msra.mxu0 0.0
      %363 = vmatprep.subr.mxu0 0.0
      %364 = vmatpush2.msra.mxu0 0.0
      %365 = vmatprep.subr.mxu0 0.0
      %366 = vmatpush2.msra.mxu0 0.0
      %367 = vmatprep.subr.mxu0 0.0
      %368 = vmatpush2.msra.mxu0 0.0
      %369 = vmatprep.mubr.f32.mxu0 0.0
      %370 = vmatmul.mubr.f32.gmra.mxu0 %v282
      %v371 = vpop.f32.mrf.mxu0
      %v372 = vadd.f32 0.0, %v371
      %v373 = vpop.f32.mrf.mxu0
      %374 = vmatprep.mubr.f32.mxu0 0.0
      %375 = vmatmul.mubr.f32.gmra.mxu0 %v285
      %v376 = vpop.f32.mrf.mxu0
      %v377 = vadd.f32 0.0, %v376
      %v378 = vpop.f32.mrf.mxu0
      %379 = vmatprep.mubr.f32.mxu0 0.0
      %380 = vmatmul.mubr.f32.gmra.mxu0 %v288
      %v381 = vpop.f32.mrf.mxu0
      %v382 = vadd.f32 0.0, %v381
      %v383 = vpop.f32.mrf.mxu0
      %384 = vmatprep.mubr.f32.mxu0 0.0
      %385 = vmatmul.mubr.f32.gmra.mxu0 %v291
      %v386 = vpop.f32.mrf.mxu0
      %v387 = vadd.f32 0.0, %v386
      %v388 = vpop.f32.mrf.mxu0
      %389 = vmatprep.mubr.f32.mxu0 0.0
      %390 = vmatmul.mubr.f32.gmra.mxu0 %v294
      %v391 = vpop.f32.mrf.mxu0
      %v392 = vadd.f32 0.0, %v391
      %v393 = vpop.f32.mrf.mxu0
      %394 = vmatprep.mubr.f32.mxu0 0.0
      %395 = vmatmul.mubr.f32.gmra.mxu0 %v297
      %v396 = vpop.f32.mrf.mxu0
      %v397 = vadd.f32 0.0, %v396
      %v398 = vpop.f32.mrf.mxu0
      %399 = vmatprep.mubr.f32.mxu0 0.0
      %400 = vmatmul.mubr.f32.gmra.mxu0 %v300
      %v401 = vpop.f32.mrf.mxu0
      %v402 = vadd.f32 0.0, %v401
      %v403 = vpop.f32.mrf.mxu0
      %404 = vmatprep.mubr.f32.mxu0 0.0
      %405 = vmatmul.mubr.f32.gmra.mxu0 %v303
      %v406 = vpop.f32.mrf.mxu0
      %v407 = vadd.f32 0.0, %v406
      %v408 = vpop.f32.mrf.mxu0
      %409 = vdwg.mxu0
      %v411 = vsel %vm280, %v251, 0
      %v414 = vsel %vm280, %v252, 0
      %v417 = vsel %vm280, %v253, 0
      %v420 = vsel %vm280, %v254, 0
      %v423 = vsel %vm280, %v255, 0
      %v426 = vsel %vm280, %v256, 0
      %v429 = vsel %vm280, %v257, 0
      %v432 = vsel %vm280, %v258, 0
      %434 = vmatprep.subr.mxu0 0.0
      %435 = vmatpush1.msra.mxu0 0.0
      %436 = vmatprep.subr.mxu0 0.0
      %437 = vmatpush1.msra.mxu0 0.0
      %438 = vmatprep.subr.mxu0 0.0
      %439 = vmatpush1.msra.mxu0 0.0
      %440 = vmatprep.subr.mxu0 0.0
      %441 = vmatpush1.msra.mxu0 0.0
      %442 = vmatprep.subr.mxu0 0.0
      %443 = vmatpush1.msra.mxu0 0.0
      %444 = vmatprep.subr.mxu0 0.0
      %445 = vmatpush1.msra.mxu0 0.0
      %446 = vmatprep.subr.mxu0 0.0
      %447 = vmatpush1.msra.mxu0 0.0
      %448 = vmatprep.subr.mxu0 0.0
      %449 = vmatpush1.msra.mxu0 0.0
      %450 = vmatprep.subr.mxu0 0.0
      %451 = vmatpush1.msra.mxu0 0.0
      %452 = vmatprep.subr.mxu0 0.0
      %453 = vmatpush1.msra.mxu0 0.0
      %454 = vmatprep.subr.mxu0 0.0
      %455 = vmatpush1.msra.mxu0 %v264
      %456 = vmatprep.subr.mxu0 0.0
      %457 = vmatpush1.msra.mxu0 %v263
      %458 = vmatprep.subr.mxu0 0.0
      %459 = vmatpush1.msra.mxu0 %v262
      %460 = vmatprep.subr.mxu0 0.0
      %461 = vmatpush1.msra.mxu0 %v261
      %462 = vmatprep.subr.mxu0 0.0
      %463 = vmatpush1.msra.mxu0 %v260
      %464 = vmatprep.subr.mxu0 0.0
      %465 = vmatpush1.msra.mxu0 %v259
      %466 = vmatprep.subr.mxu0 0.0
      %467 = vmatpush2.msra.mxu0 0.0
      %468 = vmatprep.subr.mxu0 0.0
      %469 = vmatpush2.msra.mxu0 0.0
      %470 = vmatprep.subr.mxu0 0.0
      %471 = vmatpush2.msra.mxu0 0.0
      %472 = vmatprep.subr.mxu0 0.0
      %473 = vmatpush2.msra.mxu0 0.0
      %474 = vmatprep.subr.mxu0 0.0
      %475 = vmatpush2.msra.mxu0 0.0
      %476 = vmatprep.subr.mxu0 0.0
      %477 = vmatpush2.msra.mxu0 0.0
      %478 = vmatprep.subr.mxu0 0.0
      %479 = vmatpush2.msra.mxu0 0.0
      %480 = vmatprep.subr.mxu0 0.0
      %481 = vmatpush2.msra.mxu0 0.0
      %482 = vmatprep.subr.mxu0 0.0
      %483 = vmatpush2.msra.mxu0 0.0
      %484 = vmatprep.subr.mxu0 0.0
      %485 = vmatpush2.msra.mxu0 0.0
      %486 = vmatprep.subr.mxu0 0.0
      %487 = vmatpush2.msra.mxu0 0.0
      %488 = vmatprep.subr.mxu0 0.0
      %489 = vmatpush2.msra.mxu0 0.0
      %490 = vmatprep.subr.mxu0 0.0
      %491 = vmatpush2.msra.mxu0 0.0
      %492 = vmatprep.subr.mxu0 0.0
      %493 = vmatpush2.msra.mxu0 0.0
      %494 = vmatprep.subr.mxu0 0.0
      %495 = vmatpush2.msra.mxu0 0.0
      %496 = vmatprep.subr.mxu0 0.0
      %497 = vmatpush2.msra.mxu0 0.0
      %498 = vmatprep.mubr.f32.mxu0 0.0
      %499 = vmatmul.mubr.f32.gmra.mxu0 %v411
      %v500 = vpop.f32.mrf.mxu0
      %v501 = vadd.f32 %v372, %v500
      %v502 = vpop.f32.mrf.mxu0
      %503 = vmatprep.mubr.f32.mxu0 0.0
      %504 = vmatmul.mubr.f32.gmra.mxu0 %v414
      %v505 = vpop.f32.mrf.mxu0
      %v506 = vadd.f32 %v377, %v505
      %v507 = vpop.f32.mrf.mxu0
      %508 = vmatprep.mubr.f32.mxu0 0.0
      %509 = vmatmul.mubr.f32.gmra.mxu0 %v417
      %v510 = vpop.f32.mrf.mxu0
      %v511 = vadd.f32 %v382, %v510
      %v512 = vpop.f32.mrf.mxu0
      %513 = vmatprep.mubr.f32.mxu0 0.0
      %514 = vmatmul.mubr.f32.gmra.mxu0 %v420
      %v515 = vpop.f32.mrf.mxu0
      %v516 = vadd.f32 %v387, %v515
      %v517 = vpop.f32.mrf.mxu0
      %518 = vmatprep.mubr.f32.mxu0 0.0
      %519 = vmatmul.mubr.f32.gmra.mxu0 %v423
      %v520 = vpop.f32.mrf.mxu0
      %v521 = vadd.f32 %v392, %v520
      %v522 = vpop.f32.mrf.mxu0
      %523 = vmatprep.mubr.f32.mxu0 0.0
      %524 = vmatmul.mubr.f32.gmra.mxu0 %v426
      %v525 = vpop.f32.mrf.mxu0
      %v526 = vadd.f32 %v397, %v525
      %v527 = vpop.f32.mrf.mxu0
      %528 = vmatprep.mubr.f32.mxu0 0.0
      %529 = vmatmul.mubr.f32.gmra.mxu0 %v429
      %v530 = vpop.f32.mrf.mxu0
      %v531 = vadd.f32 %v402, %v530
      %v532 = vpop.f32.mrf.mxu0
      %533 = vmatprep.mubr.f32.mxu0 0.0
      %534 = vmatmul.mubr.f32.gmra.mxu0 %v432
      %v535 = vpop.f32.mrf.mxu0
      %v536 = vadd.f32 %v407, %v535
      %v537 = vpop.f32.mrf.mxu0
      %538 = vdwg.mxu0
      %s539 = sadd.s32 %s248, 1
      %s540 = smul.u32 %s539, 16
      %s541 = scalar_lea.vmem %s237, %s540
      %v542 = vld [vmem:[%s541] sm:$0xff]
      %v543 = vld [vmem:[%s541 + $0x10] sm:$0xff]
      %v544 = vld [vmem:[%s541 + $0x20] sm:$0xff]
      %v545 = vld [vmem:[%s541 + $0x30] sm:$0xff]
      %v546 = vld [vmem:[%s541 + $0x40] sm:$0xff]
      %v547 = vld [vmem:[%s541 + $0x50] sm:$0xff]
      %v548 = vld [vmem:[%s541 + $0x60] sm:$0xff]
      %v549 = vld [vmem:[%s541 + $0x70] sm:$0xff]
      %s550 = scalar_lea.vmem %s1, 96
      %v551 = vld [vmem:[%s550] sm:$0xff]
      %v552 = vld [vmem:[%s550 + $0x8] sm:$0xff]
      %v553 = vld [vmem:[%s550 + $0x10] sm:$0xff]
      %v554 = vld [vmem:[%s550 + $0x18] sm:$0xff]
      %v555 = vld [vmem:[%s550 + $0x20] sm:$0xff]
      %v556 = vld [vmem:[%s550 + $0x28] sm:$0xff]
      %v558 = vsel %vm280, %v542, 0
      %v561 = vsel %vm280, %v543, 0
      %v564 = vsel %vm280, %v544, 0
      %v567 = vsel %vm280, %v545, 0
      %v570 = vsel %vm280, %v546, 0
      %v573 = vsel %vm280, %v547, 0
      %v576 = vsel %vm280, %v548, 0
      %v579 = vsel %vm280, %v549, 0
      %581 = vmatprep.subr.mxu0 0.0
      %582 = vmatpush1.msra.mxu0 0.0
      %583 = vmatprep.subr.mxu0 0.0
      %584 = vmatpush1.msra.mxu0 0.0
      %585 = vmatprep.subr.mxu0 0.0
      %586 = vmatpush1.msra.mxu0 0.0
      %587 = vmatprep.subr.mxu0 0.0
      %588 = vmatpush1.msra.mxu0 0.0
      %589 = vmatprep.subr.mxu0 0.0
      %590 = vmatpush1.msra.mxu0 0.0
      %591 = vmatprep.subr.mxu0 0.0
      %592 = vmatpush1.msra.mxu0 0.0
      %593 = vmatprep.subr.mxu0 0.0
      %594 = vmatpush1.msra.mxu0 0.0
      %595 = vmatprep.subr.mxu0 0.0
      %596 = vmatpush1.msra.mxu0 0.0
      %597 = vmatprep.subr.mxu0 0.0
      %598 = vmatpush1.msra.mxu0 0.0
      %599 = vmatprep.subr.mxu0 0.0
      %600 = vmatpush1.msra.mxu0 0.0
      %601 = vmatprep.subr.mxu0 0.0
      %602 = vmatpush1.msra.mxu0 %v556
      %603 = vmatprep.subr.mxu0 0.0
      %604 = vmatpush1.msra.mxu0 %v555
      %605 = vmatprep.subr.mxu0 0.0
      %606 = vmatpush1.msra.mxu0 %v554
      %607 = vmatprep.subr.mxu0 0.0
      %608 = vmatpush1.msra.mxu0 %v553
      %609 = vmatprep.subr.mxu0 0.0
      %610 = vmatpush1.msra.mxu0 %v552
      %611 = vmatprep.subr.mxu0 0.0
      %612 = vmatpush1.msra.mxu0 %v551
      %613 = vmatprep.subr.mxu0 0.0
      %614 = vmatpush2.msra.mxu0 0.0
      %615 = vmatprep.subr.mxu0 0.0
      %616 = vmatpush2.msra.mxu0 0.0
      %617 = vmatprep.subr.mxu0 0.0
      %618 = vmatpush2.msra.mxu0 0.0
      %619 = vmatprep.subr.mxu0 0.0
      %620 = vmatpush2.msra.mxu0 0.0
      %621 = vmatprep.subr.mxu0 0.0
      %622 = vmatpush2.msra.mxu0 0.0
      %623 = vmatprep.subr.mxu0 0.0
      %624 = vmatpush2.msra.mxu0 0.0
      %625 = vmatprep.subr.mxu0 0.0
      %626 = vmatpush2.msra.mxu0 0.0
      %627 = vmatprep.subr.mxu0 0.0
      %628 = vmatpush2.msra.mxu0 0.0
      %629 = vmatprep.subr.mxu0 0.0
      %630 = vmatpush2.msra.mxu0 0.0
      %631 = vmatprep.subr.mxu0 0.0
      %632 = vmatpush2.msra.mxu0 0.0
      %633 = vmatprep.subr.mxu0 0.0
      %634 = vmatpush2.msra.mxu0 0.0
      %635 = vmatprep.subr.mxu0 0.0
      %636 = vmatpush2.msra.mxu0 0.0
      %637 = vmatprep.subr.mxu0 0.0
      %638 = vmatpush2.msra.mxu0 0.0
      %639 = vmatprep.subr.mxu0 0.0
      %640 = vmatpush2.msra.mxu0 0.0
      %641 = vmatprep.subr.mxu0 0.0
      %642 = vmatpush2.msra.mxu0 0.0
      %643 = vmatprep.subr.mxu0 0.0
      %644 = vmatpush2.msra.mxu0 0.0
      %645 = vmatprep.mubr.f32.mxu0 0.0
      %646 = vmatmul.mubr.f32.gmra.mxu0 %v558
      %v647 = vpop.f32.mrf.mxu0
      %v648 = vadd.f32 0.0, %v647
      %v649 = vpop.f32.mrf.mxu0
      %650 = vmatprep.mubr.f32.mxu0 0.0
      %651 = vmatmul.mubr.f32.gmra.mxu0 %v561
      %v652 = vpop.f32.mrf.mxu0
      %v653 = vadd.f32 0.0, %v652
      %v654 = vpop.f32.mrf.mxu0
      %655 = vmatprep.mubr.f32.mxu0 0.0
      %656 = vmatmul.mubr.f32.gmra.mxu0 %v564
      %v657 = vpop.f32.mrf.mxu0
      %v658 = vadd.f32 0.0, %v657
      %v659 = vpop.f32.mrf.mxu0
      %660 = vmatprep.mubr.f32.mxu0 0.0
      %661 = vmatmul.mubr.f32.gmra.mxu0 %v567
      %v662 = vpop.f32.mrf.mxu0
      %v663 = vadd.f32 0.0, %v662
      %v664 = vpop.f32.mrf.mxu0
      %665 = vmatprep.mubr.f32.mxu0 0.0
      %666 = vmatmul.mubr.f32.gmra.mxu0 %v570
      %v667 = vpop.f32.mrf.mxu0
      %v668 = vadd.f32 0.0, %v667
      %v669 = vpop.f32.mrf.mxu0
      %670 = vmatprep.mubr.f32.mxu0 0.0
      %671 = vmatmul.mubr.f32.gmra.mxu0 %v573
      %v672 = vpop.f32.mrf.mxu0
      %v673 = vadd.f32 0.0, %v672
      %v674 = vpop.f32.mrf.mxu0
      %675 = vmatprep.mubr.f32.mxu0 0.0
      %676 = vmatmul.mubr.f32.gmra.mxu0 %v576
      %v677 = vpop.f32.mrf.mxu0
      %v678 = vadd.f32 0.0, %v677
      %v679 = vpop.f32.mrf.mxu0
      %680 = vmatprep.mubr.f32.mxu0 0.0
      %681 = vmatmul.mubr.f32.gmra.mxu0 %v579
      %v682 = vpop.f32.mrf.mxu0
      %v683 = vadd.f32 0.0, %v682
      %v684 = vpop.f32.mrf.mxu0
      %685 = vdwg.mxu0
      %v686 = vadd.f32 %v501, %v648
      %v687 = vadd.f32 %v506, %v653
      %v688 = vadd.f32 %v511, %v658
      %v689 = vadd.f32 %v516, %v663
      %v690 = vadd.f32 %v521, %v668
      %v691 = vadd.f32 %v526, %v673
      %v692 = vadd.f32 %v531, %v678
      %v693 = vadd.f32 %v536, %v683
      %v694 = vld [vmem:[%s541 + $0x1] sm:$0xff]
      %v695 = vld [vmem:[%s541 + $0x11] sm:$0xff]
      %v696 = vld [vmem:[%s541 + $0x21] sm:$0xff]
      %v697 = vld [vmem:[%s541 + $0x31] sm:$0xff]
      %v698 = vld [vmem:[%s541 + $0x41] sm:$0xff]
      %v699 = vld [vmem:[%s541 + $0x51] sm:$0xff]
      %v700 = vld [vmem:[%s541 + $0x61] sm:$0xff]
      %v701 = vld [vmem:[%s541 + $0x71] sm:$0xff]
      %s702 = scalar_lea.vmem %s1, 144
      %v703 = vld [vmem:[%s702] sm:$0xff]
      %v704 = vld [vmem:[%s702 + $0x8] sm:$0xff]
      %v705 = vld [vmem:[%s702 + $0x10] sm:$0xff]
      %v706 = vld [vmem:[%s702 + $0x18] sm:$0xff]
      %v707 = vld [vmem:[%s702 + $0x20] sm:$0xff]
      %v708 = vld [vmem:[%s702 + $0x28] sm:$0xff]
      %v710 = vsel %vm280, %v694, 0
      %v713 = vsel %vm280, %v695, 0
      %v716 = vsel %vm280, %v696, 0
      %v719 = vsel %vm280, %v697, 0
      %v722 = vsel %vm280, %v698, 0
      %v725 = vsel %vm280, %v699, 0
      %v728 = vsel %vm280, %v700, 0
      %v731 = vsel %vm280, %v701, 0
      %733 = vmatprep.subr.mxu0 0.0
      %734 = vmatpush1.msra.mxu0 0.0
      %735 = vmatprep.subr.mxu0 0.0
      %736 = vmatpush1.msra.mxu0 0.0
      %737 = vmatprep.subr.mxu0 0.0
      %738 = vmatpush1.msra.mxu0 0.0
      %739 = vmatprep.subr.mxu0 0.0
      %740 = vmatpush1.msra.mxu0 0.0
      %741 = vmatprep.subr.mxu0 0.0
      %742 = vmatpush1.msra.mxu0 0.0
      %743 = vmatprep.subr.mxu0 0.0
      %744 = vmatpush1.msra.mxu0 0.0
      %745 = vmatprep.subr.mxu0 0.0
      %746 = vmatpush1.msra.mxu0 0.0
      %747 = vmatprep.subr.mxu0 0.0
      %748 = vmatpush1.msra.mxu0 0.0
      %749 = vmatprep.subr.mxu0 0.0
      %750 = vmatpush1.msra.mxu0 0.0
      %751 = vmatprep.subr.mxu0 0.0
      %752 = vmatpush1.msra.mxu0 0.0
      %753 = vmatprep.subr.mxu0 0.0
      %754 = vmatpush1.msra.mxu0 %v708
      %755 = vmatprep.subr.mxu0 0.0
      %756 = vmatpush1.msra.mxu0 %v707
      %757 = vmatprep.subr.mxu0 0.0
      %758 = vmatpush1.msra.mxu0 %v706
      %759 = vmatprep.subr.mxu0 0.0
      %760 = vmatpush1.msra.mxu0 %v705
      %761 = vmatprep.subr.mxu0 0.0
      %762 = vmatpush1.msra.mxu0 %v704
      %763 = vmatprep.subr.mxu0 0.0
      %764 = vmatpush1.msra.mxu0 %v703
      %765 = vmatprep.subr.mxu0 0.0
      %766 = vmatpush2.msra.mxu0 0.0
      %767 = vmatprep.subr.mxu0 0.0
      %768 = vmatpush2.msra.mxu0 0.0
      %769 = vmatprep.subr.mxu0 0.0
      %770 = vmatpush2.msra.mxu0 0.0
      %771 = vmatprep.subr.mxu0 0.0
      %772 = vmatpush2.msra.mxu0 0.0
      %773 = vmatprep.subr.mxu0 0.0
      %774 = vmatpush2.msra.mxu0 0.0
      %775 = vmatprep.subr.mxu0 0.0
      %776 = vmatpush2.msra.mxu0 0.0
      %777 = vmatprep.subr.mxu0 0.0
      %778 = vmatpush2.msra.mxu0 0.0
      %779 = vmatprep.subr.mxu0 0.0
      %780 = vmatpush2.msra.mxu0 0.0
      %781 = vmatprep.subr.mxu0 0.0
      %782 = vmatpush2.msra.mxu0 0.0
      %783 = vmatprep.subr.mxu0 0.0
      %784 = vmatpush2.msra.mxu0 0.0
      %785 = vmatprep.subr.mxu0 0.0
      %786 = vmatpush2.msra.mxu0 0.0
      %787 = vmatprep.subr.mxu0 0.0
      %788 = vmatpush2.msra.mxu0 0.0
      %789 = vmatprep.subr.mxu0 0.0
      %790 = vmatpush2.msra.mxu0 0.0
      %791 = vmatprep.subr.mxu0 0.0
      %792 = vmatpush2.msra.mxu0 0.0
      %793 = vmatprep.subr.mxu0 0.0
      %794 = vmatpush2.msra.mxu0 0.0
      %795 = vmatprep.subr.mxu0 0.0
      %796 = vmatpush2.msra.mxu0 0.0
      %797 = vmatprep.mubr.f32.mxu0 0.0
      %798 = vmatmul.mubr.f32.gmra.mxu0 %v710
      %v799 = vpop.f32.mrf.mxu0
      %v800 = vadd.f32 0.0, %v799
      %v801 = vpop.f32.mrf.mxu0
      %802 = vmatprep.mubr.f32.mxu0 0.0
      %803 = vmatmul.mubr.f32.gmra.mxu0 %v713
      %v804 = vpop.f32.mrf.mxu0
      %v805 = vadd.f32 0.0, %v804
      %v806 = vpop.f32.mrf.mxu0
      %807 = vmatprep.mubr.f32.mxu0 0.0
      %808 = vmatmul.mubr.f32.gmra.mxu0 %v716
      %v809 = vpop.f32.mrf.mxu0
      %v810 = vadd.f32 0.0, %v809
      %v811 = vpop.f32.mrf.mxu0
      %812 = vmatprep.mubr.f32.mxu0 0.0
      %813 = vmatmul.mubr.f32.gmra.mxu0 %v719
      %v814 = vpop.f32.mrf.mxu0
      %v815 = vadd.f32 0.0, %v814
      %v816 = vpop.f32.mrf.mxu0
      %817 = vmatprep.mubr.f32.mxu0 0.0
      %818 = vmatmul.mubr.f32.gmra.mxu0 %v722
      %v819 = vpop.f32.mrf.mxu0
      %v820 = vadd.f32 0.0, %v819
      %v821 = vpop.f32.mrf.mxu0
      %822 = vmatprep.mubr.f32.mxu0 0.0
      %823 = vmatmul.mubr.f32.gmra.mxu0 %v725
      %v824 = vpop.f32.mrf.mxu0
      %v825 = vadd.f32 0.0, %v824
      %v826 = vpop.f32.mrf.mxu0
      %827 = vmatprep.mubr.f32.mxu0 0.0
      %828 = vmatmul.mubr.f32.gmra.mxu0 %v728
      %v829 = vpop.f32.mrf.mxu0
      %v830 = vadd.f32 0.0, %v829
      %v831 = vpop.f32.mrf.mxu0
      %832 = vmatprep.mubr.f32.mxu0 0.0
      %833 = vmatmul.mubr.f32.gmra.mxu0 %v731
      %v834 = vpop.f32.mrf.mxu0
      %v835 = vadd.f32 0.0, %v834
      %v836 = vpop.f32.mrf.mxu0
      %837 = vdwg.mxu0
      %v838 = vadd.f32 %v686, %v800
      %v839 = vadd.f32 %v687, %v805
      %v840 = vadd.f32 %v688, %v810
      %v841 = vadd.f32 %v689, %v815
      %v842 = vadd.f32 %v690, %v820
      %v843 = vadd.f32 %v691, %v825
      %v844 = vadd.f32 %v692, %v830
      %v845 = vadd.f32 %v693, %v835
      %v846 = vld [vmem:[%s2] sm:$0x1]
      %v848 = vlaneseq
      %v849 = vshrl.u32 %v848, 7
      %v850 = vsub.s32 0, %v849
      %v851 = vrot.slane %v846, %v850
      %v853 = vadd.f32 %v838, %v851
      %v854 = vadd.f32 %v839, %v851
      %v855 = vadd.f32 %v840, %v851
      %v856 = vadd.f32 %v841, %v851
      %v857 = vadd.f32 %v842, %v851
      %v858 = vadd.f32 %v843, %v851
      %v859 = vadd.f32 %v844, %v851
      %v860 = vadd.f32 %v845, %v851
      %861 = vadd.xlane.f32.xlu0 %v853
      %v862 = vpop.xlane.xlu0 %861
      %863 = vadd.xlane.f32.xlu0 %v854
      %v864 = vpop.xlane.xlu0 %863
      %865 = vadd.xlane.f32.xlu0 %v855
      %v866 = vpop.xlane.xlu0 %865
      %867 = vadd.xlane.f32.xlu0 %v856
      %v868 = vpop.xlane.xlu0 %867
      %869 = vadd.xlane.f32.xlu0 %v857
      %v870 = vpop.xlane.xlu0 %869
      %871 = vadd.xlane.f32.xlu0 %v858
      %v872 = vpop.xlane.xlu0 %871
      %873 = vadd.xlane.f32.xlu0 %v859
      %v874 = vpop.xlane.xlu0 %873
      %875 = vadd.xlane.f32.xlu0 %v860
      %v876 = vpop.xlane.xlu0 %875
      %v877 = vmul.f32 %v862, 0.03125
      %v878 = vmul.f32 %v864, 0.03125
      %v879 = vmul.f32 %v866, 0.03125
      %v880 = vmul.f32 %v868, 0.03125
      %v881 = vmul.f32 %v870, 0.03125
      %v882 = vmul.f32 %v872, 0.03125
      %v883 = vmul.f32 %v874, 0.03125
      %v884 = vmul.f32 %v876, 0.03125
      %v885 = vsub.f32 %v853, %v877
      %v886 = vsub.f32 %v854, %v878
      %v887 = vsub.f32 %v855, %v879
      %v888 = vsub.f32 %v856, %v880
      %v889 = vsub.f32 %v857, %v881
      %v890 = vsub.f32 %v858, %v882
      %v891 = vsub.f32 %v859, %v883
      %v892 = vsub.f32 %v860, %v884
      %v893 = vlaneseq
      %v894 = vand.u32 %v893, 127
      %vm895 = vcmp.lt.s32.totalorder %v894, 32
      %v896 = vsel %vm895, 1, 0
      %v897 = vcvt.s32.f32 %v896
      %v898 = vmul.f32 %v885, %v897
      %v899 = vmul.f32 %v886, %v897
      %v900 = vmul.f32 %v887, %v897
      %v901 = vmul.f32 %v888, %v897
      %v902 = vmul.f32 %v889, %v897
      %v903 = vmul.f32 %v890, %v897
      %v904 = vmul.f32 %v891, %v897
      %v905 = vmul.f32 %v892, %v897
      %v906 = vmul.f32 %v898, %v898
      %v907 = vmul.f32 %v899, %v899
      %v908 = vmul.f32 %v900, %v900
      %v909 = vmul.f32 %v901, %v901
      %v910 = vmul.f32 %v902, %v902
      %v911 = vmul.f32 %v903, %v903
      %v912 = vmul.f32 %v904, %v904
      %v913 = vmul.f32 %v905, %v905
      %914 = vadd.xlane.f32.xlu0 %v906
      %v915 = vpop.xlane.xlu0 %914
      %916 = vadd.xlane.f32.xlu0 %v907
      %v917 = vpop.xlane.xlu0 %916
      %918 = vadd.xlane.f32.xlu0 %v908
      %v919 = vpop.xlane.xlu0 %918
      %920 = vadd.xlane.f32.xlu0 %v909
      %v921 = vpop.xlane.xlu0 %920
      %922 = vadd.xlane.f32.xlu0 %v910
      %v923 = vpop.xlane.xlu0 %922
      %924 = vadd.xlane.f32.xlu0 %v911
      %v925 = vpop.xlane.xlu0 %924
      %926 = vadd.xlane.f32.xlu0 %v912
      %v927 = vpop.xlane.xlu0 %926
      %928 = vadd.xlane.f32.xlu0 %v913
      %v929 = vpop.xlane.xlu0 %928
      %v930 = vmul.f32 %v915, 0.03125
      %v931 = vmul.f32 %v917, 0.03125
      %v932 = vmul.f32 %v919, 0.03125
      %v933 = vmul.f32 %v921, 0.03125
      %v934 = vmul.f32 %v923, 0.03125
      %v935 = vmul.f32 %v925, 0.03125
      %v936 = vmul.f32 %v927, 0.03125
      %v937 = vmul.f32 %v929, 0.03125
      %v938 = vadd.f32 %v930, 1e-05
      %v939 = vadd.f32 %v931, 1e-05
      %v940 = vadd.f32 %v932, 1e-05
      %v941 = vadd.f32 %v933, 1e-05
      %v942 = vadd.f32 %v934, 1e-05
      %v943 = vadd.f32 %v935, 1e-05
      %v944 = vadd.f32 %v936, 1e-05
      %v945 = vadd.f32 %v937, 1e-05
      %v946 = vrsqrt.pop %v938
      %v947 = vrsqrt.pop %v939
      %v948 = vrsqrt.pop %v940
      %v949 = vrsqrt.pop %v941
      %v950 = vrsqrt.pop %v942
      %v951 = vrsqrt.pop %v943
      %v952 = vrsqrt.pop %v944
      %v953 = vrsqrt.pop %v945
      %v954 = vmul.f32 %v898, %v946
      %v955 = vmul.f32 %v899, %v947
      %v956 = vmul.f32 %v900, %v948
      %v957 = vmul.f32 %v901, %v949
      %v958 = vmul.f32 %v902, %v950
      %v959 = vmul.f32 %v903, %v951
      %v960 = vmul.f32 %v904, %v952
      %v961 = vmul.f32 %v905, %v953
      %v962 = vld [vmem:[%s3] sm:$0x1]
      %v964 = vlaneseq
      %v965 = vshrl.u32 %v964, 7
      %v966 = vsub.s32 0, %v965
      %v967 = vrot.slane %v962, %v966
      %v969 = vmul.f32 %v954, %v967
      %v970 = vmul.f32 %v955, %v967
      %v971 = vmul.f32 %v956, %v967
      %v972 = vmul.f32 %v957, %v967
      %v973 = vmul.f32 %v958, %v967
      %v974 = vmul.f32 %v959, %v967
      %v975 = vmul.f32 %v960, %v967
      %v976 = vmul.f32 %v961, %v967
      %v977 = vld [vmem:[%s4] sm:$0x1]
      %v979 = vlaneseq
      %v980 = vshrl.u32 %v979, 7
      %v981 = vsub.s32 0, %v980
      %v982 = vrot.slane %v977, %v981
      %v984 = vadd.f32 %v969, %v982
      %v985 = vadd.f32 %v970, %v982
      %v986 = vadd.f32 %v971, %v982
      %v987 = vadd.f32 %v972, %v982
      %v988 = vadd.f32 %v973, %v982
      %v989 = vadd.f32 %v974, %v982
      %v990 = vadd.f32 %v975, %v982
      %v991 = vadd.f32 %v976, %v982
      %992 = vst [vmem:[%s246] sm:$0xff] %v984
      %993 = vst [vmem:[%s246 + $0x8] sm:$0xff] %v985
      %994 = vst [vmem:[%s246 + $0x10] sm:$0xff] %v986
      %995 = vst [vmem:[%s246 + $0x18] sm:$0xff] %v987
      %996 = vst [vmem:[%s246 + $0x20] sm:$0xff] %v988
      %997 = vst [vmem:[%s246 + $0x28] sm:$0xff] %v989
      %998 = vst [vmem:[%s246 + $0x30] sm:$0xff] %v990
      %999 = vst [vmem:[%s246 + $0x38] sm:$0xff] %v991
      %s1000 = smul.u32 8, %s21
      %p1001 = scmp.lt.s32.totalorder %s20, 1
      %s1002 = scalar_select %p1001, %s20, 1
      %p1003 = scmp.lt.s32.totalorder %s1000, 7
      %s1004 = scalar_select %p1003, %s1000, 7
      %s1005 = smul.addr %s1002, 8
      %s1006 = sadd.s32 %s1004, %s1005
      %s1007 = smul.addr %s1006, 8
      %s1008 = scalar_lea.vmem %s5, %s1007
      // Predicated region
      $region41: #{overlap_patch_embed.1} parent=39 // pred_check
        %p1009 = pneg %p158
      $region42: #{overlap_patch_embed.1} parent=39 // pred_check_branch
        %1011 = sbr.rel (%p1009) target = $region44
      $region43: #{overlap_patch_embed.1} parent=39 // pred_region
        %s1012 = smul.u32 8, %s21
      $region44: #{overlap_patch_embed.1} parent=39 // pred_fallthru
        _
    $region40: #{overlap_patch_embed.1} parent=5 // pred_fallthru
      _
    %p1013 = scmp.le.s32.totalorder 2, %s11
    // Predicated region
    $region45: #{overlap_patch_embed.1} parent=5 // pred_check
      %p1014 = pneg %p1013
    $region46: #{overlap_patch_embed.1} parent=5 // pred_check_branch
      %1016 = sbr.rel (%p1014) target = $region48
    $region47: #{overlap_patch_embed.1} parent=5 // pred_region
      %s1017 = ssub.s32 %s11, 2
      // Predicated region
      $region49: #{overlap_patch_embed.1} parent=47 // pred_check
        %p1018 = pneg %p164
      $region50: #{overlap_patch_embed.1} parent=47 // pred_check_branch
        %1020 = sbr.rel (%p1018) target = $region52
      $region51: #{overlap_patch_embed.1} parent=47 // pred_region
        %s1021 = smul.u32 8, %s23
        %p1022 = scmp.lt.s32.totalorder %s22, 1
        %s1023 = scalar_select %p1022, %s22, 1
        %p1024 = scmp.lt.s32.totalorder %s1021, 7
        %s1025 = scalar_select %p1024, %s1021, 7
        %s1026 = smul.addr %s1023, 8
        %s1027 = sadd.s32 %s1025, %s1026
        %s1028 = smul.addr %s1027, 8
        %s1029 = scalar_lea.vmem %s5, %s1028
      $region52: #{overlap_patch_embed.1} parent=47 // pred_fallthru
        _
    $region48: #{overlap_patch_embed.1} parent=5 // pred_fallthru
      _
  $region6: #{overlap_patch_embed.1} parent=0 // loop_footer
    %s15 = sadd.s32 1, %s11
  $region7: #{overlap_patch_embed.1} parent=0 // loop_footer_branch
    %10 = sbr.rel target = $region3
  $region8: #{overlap_patch_embed.1} parent=0 // loop_exit
    _

</llo_original>
